<compile_context>
chip_gen: v7x
topology: tpu7x:2x2x1
jax: 0.10.0
libtpu: 0.0.40
codegen_flags: <defaults>
</compile_context>

<pallas_src>
import functools
import math

import numpy as np
import jax
import jax.numpy as jnp
from jax.experimental import pallas as pl
from jax.experimental.pallas import tpu as pltpu


def _adaptive_avg_pool_matrix(in_size: int, out_size: int) -> np.ndarray:
    """Matrix W (out, in) such that W @ v == F.adaptive_avg_pool1d(v, out)."""
    w = np.zeros((out_size, in_size), dtype=np.float64)
    for i in range(out_size):
        s = (i * in_size) // out_size
        e = -((-(i + 1) * in_size) // out_size)  # ceil((i+1)*in/out)
        w[i, s:e] = 1.0 / float(e - s)
    return w


def _round_up(v: int, m: int) -> int:
    return ((v + m - 1) // m) * m


# ---------------------------------------------------------------------------
# Fused Pallas kernel: pool -> conv1d x2 -> sigmoid/mix -> upsample -> scale
# ---------------------------------------------------------------------------
def _mlca_kernel(x_ref, ppt_ref, wcat_ref, wg_ref, csum_ref, prepe_ref, u_ref,
                 o_ref, *, local_weight, inv_p, pwidth):
    f32 = jnp.float32
    x = x_ref[...].astype(f32)                                           # (BC, MN)

    # Pooled slabs and their +/-1 spatial-bin shifts from ONE lane-wide MXU matmul:
    # the shift is baked into the host-built operator; each group is 128-lane aligned,
    # so the slices below are whole vreg column groups (no relayout).
    local_wide = jnp.dot(x, ppt_ref[...], preferred_element_type=f32)    # (BC, 3*PW)
    loc = local_wide[:, 0:pwidth]
    loc_p = local_wide[:, pwidth:2 * pwidth]
    loc_m = local_wide[:, 2 * pwidth:3 * pwidth]

    def sigmoid(v):
        # 0.5*tanh(0.5 v)+0.5 == sigmoid(v): transcendental on the EUP, no VALU divide.
        return 0.5 * jnp.tanh(0.5 * v) + 0.5

    # ---- local branch: the flattened [p*C + c] conv over all B samples as one
    #      block-diagonal matmul (main taps + the channel-boundary wrap taps that
    #      read the +/-1 spatial bin).
    lcat = jnp.concatenate([loc, loc_p, loc_m], axis=0)                  # (3*BC, PW)
    y_loc = jnp.dot(wcat_ref[...], lcat, preferred_element_type=f32)     # (BC, PW)
    att_l = sigmoid(y_loc)

    # ---- global branch (couples all batch elements): the channel conv commutes with
    #      the spatial mean; the module's quirky adaptive pool over the batch axis plus
    #      broadcast back to every sample is the precomputed kron(1_BxB, I_C) matmul.
    y_glb = jnp.sum(jnp.dot(wg_ref[...], loc, preferred_element_type=f32),
                    axis=-1, keepdims=True) * inv_p                      # (BC, 1)
    sg = sigmoid(y_glb)                                                  # (BC, 1)
    att_g = jnp.dot(csum_ref[...], sg * prepe_ref[...],
                    preferred_element_type=f32)                          # (BC, PW), already * (1 - lw)

    # ---- mix, upsample back to (M, N), scale x: single lane-dense full-ref store.
    att_mix = local_weight * att_l + att_g                               # (BC, PW)
    up = jnp.dot(att_mix, u_ref[...], preferred_element_type=f32)        # (BC, MN)
    o_ref[...] = (x * up).astype(o_ref.dtype)


@functools.partial(jax.jit, static_argnames=("local_size", "local_weight"))
def mlca_forward(x, w_conv, w_conv_local, *, local_size=5, local_weight=0.5):
    B, C, M, N = x.shape
    LS = local_size
    P = LS * LS
    MN = M * N
    BC = B * C
    k = int(w_conv.shape[0])
    pad = (k - 1) // 2
    if pad >= C:
        raise ValueError("conv kernel padding must be smaller than channel count")

    PW = _round_up(P, 128)  # pooled axis padded to whole vreg column groups

    # ---- host-side constant operators (exact adaptive-avg-pool semantics) ----
    ph = _adaptive_avg_pool_matrix(M, LS)          # (LS, M)
    pw_mat = _adaptive_avg_pool_matrix(N, LS)      # (LS, N)
    uh = _adaptive_avg_pool_matrix(LS, M)          # (M, LS)
    uw = _adaptive_avg_pool_matrix(LS, N)          # (N, LS)
    pb = _adaptive_avg_pool_matrix(B, LS)          # (LS, B)  batch-pool quirk

    ppt = np.kron(ph, pw_mat).T                    # (MN, P) pooling operator
    ppt_wide = np.zeros((MN, 3 * PW))
    ppt_wide[:, 0:P] = ppt                                  # pooled slabs
    ppt_wide[:, PW:PW + P - 1] = ppt[:, 1:]                 # shifted to bin p+1 (zero at p=P-1)
    ppt_wide[:, 2 * PW + 1:2 * PW + P] = ppt[:, :P - 1]     # shifted to bin p-1 (zero at p=0)

    u128 = np.zeros((PW, MN))
    u128[:P, :] = np.kron(uh, uw).T                # upsample; zero rows kill padding lanes

    prepe = np.zeros((BC, PW))                     # prepe[b*C+c, i*LS+j] = (1-lw) * pb[i, b]
    prepe[:, :P] = (1.0 - local_weight) * np.kron(np.repeat(pb.T, C, axis=0),
                                                  np.ones((1, LS)))
    csum = np.kron(np.ones((B, B)), np.eye(C))     # batch-pool sum + broadcast back

    # ---- weight-dependent (C, C) conv band matrices (tiny XLA ops, hoisted) ----
    wl = w_conv_local.astype(jnp.float32)
    wg = w_conv.astype(jnp.float32)
    ci = jnp.arange(C)
    diff = ci[None, :] - ci[:, None]               # col - row
    zcc = jnp.zeros((C, C), jnp.float32)
    w_main, w_glob, w_plus, w_minus = zcc, zcc, zcc, zcc
    for d in range(-pad, pad + 1):
        band = (diff == d).astype(jnp.float32)
        w_main = w_main + wl[d + pad] * band       # local-branch taps inside the block
        w_glob = w_glob + wg[d + pad] * band       # global-branch conv over channels
    for d in range(1, pad + 1):                    # taps wrapping to spatial bin p+1
        w_plus = w_plus + wl[d + pad] * (diff == d - C).astype(jnp.float32)
    for d in range(-pad, 0):                       # taps wrapping to spatial bin p-1
        w_minus = w_minus + wl[d + pad] * (diff == d + C).astype(jnp.float32)
    eye_b = jnp.eye(B, dtype=jnp.float32)
    wcat = jnp.concatenate([jnp.kron(eye_b, w_main),
                            jnp.kron(eye_b, w_plus),
                            jnp.kron(eye_b, w_minus)], axis=1)   # (BC, 3*BC)
    wg_bd = jnp.kron(eye_b, w_glob)                              # (BC, BC)

    x_flat = x.reshape(BC, MN)                     # pure view of NCHW, native dtype

    kernel = functools.partial(_mlca_kernel,
                               local_weight=float(local_weight),
                               inv_p=1.0 / float(P),
                               pwidth=PW)
    vmem = pl.BlockSpec(memory_space=pltpu.MemorySpace.VMEM)
    out_flat = pl.pallas_call(
        kernel,
        out_shape=jax.ShapeDtypeStruct((BC, MN), x.dtype),
        in_specs=[vmem] * 7,
        out_specs=vmem,
    )(x_flat,
      jnp.asarray(ppt_wide, jnp.float32),
      wcat,
      wg_bd,
      jnp.asarray(csum, jnp.float32),
      jnp.asarray(prepe, jnp.float32),
      jnp.asarray(u128, jnp.float32))

    return out_flat.reshape(B, C, M, N)


# ---------------------------------------------------------------------------
# Pure-JAX reference (mirrors the PyTorch module) for the correctness check.
# ---------------------------------------------------------------------------
def mlca_reference(x, w_conv, w_conv_local, *, local_size=5, local_weight=0.5):
    B, C, M, N = x.shape
    LS = local_size
    hp = jax.lax.Precision.HIGHEST
    ph = jnp.asarray(_adaptive_avg_pool_matrix(M, LS), dtype=jnp.float32)
    pw = jnp.asarray(_adaptive_avg_pool_matrix(N, LS), dtype=jnp.float32)
    pb = jnp.asarray(_adaptive_avg_pool_matrix(B, LS), dtype=jnp.float32)
    uh = jnp.asarray(_adaptive_avg_pool_matrix(LS, M), dtype=jnp.float32)
    uw = jnp.asarray(_adaptive_avg_pool_matrix(LS, N), dtype=jnp.float32)

    local_arv = jnp.einsum('im,bcmn,jn->bcij', ph, x, pw, precision=hp)
    global_arv = jnp.mean(local_arv, axis=(2, 3))
    temp_local = jnp.transpose(local_arv.reshape(B, C, LS * LS),
                               (0, 2, 1)).reshape(B, LS * LS * C)

    k = int(w_conv.shape[0])
    pad = (k - 1) // 2

    def conv1d(v, w):
        vp = jnp.pad(v, ((0, 0), (pad, pad)))
        return sum(w[j] * vp[:, j:j + v.shape[1]] for j in range(k))

    y_local = conv1d(temp_local, w_conv_local)
    y_global = conv1d(global_arv, w_conv)
    y_local_t = jnp.transpose(y_local.reshape(B, LS * LS, C),
                              (0, 2, 1)).reshape(B, C, LS, LS)
    att_local = jax.nn.sigmoid(y_local_t)
    sg = jax.nn.sigmoid(y_global)                                # (B, C)
    ag = jnp.matmul(pb, sg, precision=hp)                        # (LS, C): pooled over batch
    att_global = jnp.broadcast_to(ag.T[:, :, None], (C, LS, LS))
    att_mix = att_global[None] * (1.0 - local_weight) + att_local * local_weight
    att_all = jnp.einsum('ip,bcpq,jq->bcij', uh, att_mix, uw, precision=hp)
    return x * att_all


if __name__ == "__main__":
    B, C, M, N = 2, 8, 16, 16
    LOCAL_SIZE, GAMMA, B_HYP, LOCAL_WEIGHT = 5, 2, 1, 0.5

    # kernel size as in MLCA.__init__ (in_size = C); log2 == math.log(C, 2)
    t = int(abs(math.log2(C) + B_HYP) / GAMMA)
    k = t if t % 2 else t + 1  # -> 3 for C=8

    key = jax.random.PRNGKey(0)
    kx, kw1, kw2 = jax.random.split(key, 3)
    x = jax.random.normal(kx, (B, C, M, N), dtype=jnp.float32)
    bound = 1.0 / math.sqrt(k)  # Conv1d(1,1,k) fan_in = k
    w_conv = jax.random.uniform(kw1, (k,), minval=-bound, maxval=bound,
                                dtype=jnp.float32)
    w_conv_local = jax.random.uniform(kw2, (k,), minval=-bound, maxval=bound,
                                      dtype=jnp.float32)

    out = mlca_forward(x, w_conv, w_conv_local,
                       local_size=LOCAL_SIZE, local_weight=LOCAL_WEIGHT)
    out = jax.block_until_ready(out)

    ref = mlca_reference(x, w_conv, w_conv_local,
                         local_size=LOCAL_SIZE, local_weight=LOCAL_WEIGHT)
    assert out.shape == (B, C, M, N)
    assert out.dtype == x.dtype
    assert bool(jnp.all(jnp.isfinite(out)))
    np.testing.assert_allclose(np.asarray(out), np.asarray(ref),
                               rtol=1e-3, atol=1e-3)
    print("KERNEL_OK")
</pallas_src>

<mosaic_0001>
module attributes {stable_mosaic.version = 11 : i64} {
  func.func @_mlca_kernel(%arg0: memref<16x256xf32, #tpu.memory_space<vmem>>, %arg1: memref<256x384xf32, #tpu.memory_space<vmem>>, %arg2: memref<16x48xf32, #tpu.memory_space<vmem>>, %arg3: memref<16x16xf32, #tpu.memory_space<vmem>>, %arg4: memref<16x16xf32, #tpu.memory_space<vmem>>, %arg5: memref<16x128xf32, #tpu.memory_space<vmem>>, %arg6: memref<128x256xf32, #tpu.memory_space<vmem>>, %arg7: memref<16x256xf32, #tpu.memory_space<vmem>>) attributes {dimension_semantics = [], scalar_prefetch = 0 : i64, scratch_operands = 0 : i64, tpu.core_type = #tpu.core_type<tc>} {
    %c0 = arith.constant 0 : index
    %c0_0 = arith.constant 0 : index
    %0 = vector.load %arg0[%c0, %c0_0] : memref<16x256xf32, #tpu.memory_space<vmem>>, vector<16x256xf32>
    %c0_1 = arith.constant 0 : index
    %c0_2 = arith.constant 0 : index
    %1 = vector.load %arg1[%c0_1, %c0_2] : memref<256x384xf32, #tpu.memory_space<vmem>>, vector<256x384xf32>
    %cst = arith.constant dense<0.000000e+00> : vector<16x384xf32>
    %2 = tpu.matmul %0, %1, %cst {dimension_numbers = #tpu.dot_dimension_numbers<[1], [0], [0], [1], [0, 0, 1, 1], [], []>} : vector<16x256xf32>, vector<256x384xf32>, vector<16x384xf32> -> vector<16x384xf32>
    %3 = vector.extract_strided_slice %2 {offsets = [0, 0], sizes = [16, 128], strides = [1, 1]} : vector<16x384xf32> to vector<16x128xf32>
    %4 = vector.extract_strided_slice %2 {offsets = [0, 128], sizes = [16, 128], strides = [1, 1]} : vector<16x384xf32> to vector<16x128xf32>
    %5 = vector.extract_strided_slice %2 {offsets = [0, 256], sizes = [16, 128], strides = [1, 1]} : vector<16x384xf32> to vector<16x128xf32>
    %6 = tpu.concatenate %3, %4, %5 in 0 : vector<16x128xf32>, vector<16x128xf32>, vector<16x128xf32> -> vector<48x128xf32>
    %c0_3 = arith.constant 0 : index
    %c0_4 = arith.constant 0 : index
    %7 = vector.load %arg2[%c0_3, %c0_4] : memref<16x48xf32, #tpu.memory_space<vmem>>, vector<16x48xf32>
    %cst_5 = arith.constant dense<0.000000e+00> : vector<16x128xf32>
    %8 = tpu.matmul %7, %6, %cst_5 {dimension_numbers = #tpu.dot_dimension_numbers<[1], [0], [0], [1], [0, 0, 1, 1], [], []>} : vector<16x48xf32>, vector<48x128xf32>, vector<16x128xf32> -> vector<16x128xf32>
    %cst_6 = arith.constant 5.000000e-01 : f32
    %9 = vector.broadcast %cst_6 : f32 to vector<16x128xf32>
    %10 = arith.mulf %9, %8 : vector<16x128xf32>
    %11 = math.tanh %10 : vector<16x128xf32>
    %cst_7 = arith.constant 5.000000e-01 : f32
    %12 = vector.broadcast %cst_7 : f32 to vector<16x128xf32>
    %13 = arith.mulf %12, %11 : vector<16x128xf32>
    %cst_8 = arith.constant 5.000000e-01 : f32
    %14 = vector.broadcast %cst_8 : f32 to vector<16x128xf32>
    %15 = arith.addf %13, %14 : vector<16x128xf32>
    %c0_9 = arith.constant 0 : index
    %c0_10 = arith.constant 0 : index
    %16 = vector.load %arg3[%c0_9, %c0_10] : memref<16x16xf32, #tpu.memory_space<vmem>>, vector<16x16xf32>
    %cst_11 = arith.constant dense<0.000000e+00> : vector<16x128xf32>
    %17 = tpu.matmul %16, %3, %cst_11 {dimension_numbers = #tpu.dot_dimension_numbers<[1], [0], [0], [1], [0, 0, 1, 1], [], []>} : vector<16x16xf32>, vector<16x128xf32>, vector<16x128xf32> -> vector<16x128xf32>
    %cst_12 = arith.constant dense<0.000000e+00> : vector<16xf32>
    %18 = vector.multi_reduction <add>, %17, %cst_12 [1] : vector<16x128xf32> to vector<16xf32>
    %19 = vector.shape_cast %18 : vector<16xf32> to vector<16x1xf32>
    %cst_13 = arith.constant 4.000000e-02 : f32
    %20 = vector.broadcast %cst_13 : f32 to vector<16x1xf32>
    %21 = arith.mulf %19, %20 : vector<16x1xf32>
    %cst_14 = arith.constant 5.000000e-01 : f32
    %22 = vector.broadcast %cst_14 : f32 to vector<16x1xf32>
    %23 = arith.mulf %22, %21 : vector<16x1xf32>
    %24 = math.tanh %23 : vector<16x1xf32>
    %cst_15 = arith.constant 5.000000e-01 : f32
    %25 = vector.broadcast %cst_15 : f32 to vector<16x1xf32>
    %26 = arith.mulf %25, %24 : vector<16x1xf32>
    %cst_16 = arith.constant 5.000000e-01 : f32
    %27 = vector.broadcast %cst_16 : f32 to vector<16x1xf32>
    %28 = arith.addf %26, %27 : vector<16x1xf32>
    %c0_17 = arith.constant 0 : index
    %c0_18 = arith.constant 0 : index
    %29 = vector.load %arg4[%c0_17, %c0_18] : memref<16x16xf32, #tpu.memory_space<vmem>>, vector<16x16xf32>
    %c0_19 = arith.constant 0 : index
    %c0_20 = arith.constant 0 : index
    %30 = vector.load %arg5[%c0_19, %c0_20] : memref<16x128xf32, #tpu.memory_space<vmem>>, vector<16x128xf32>
    %31 = vector.broadcast %28 : vector<16x1xf32> to vector<16x128xf32>
    %32 = arith.mulf %31, %30 : vector<16x128xf32>
    %cst_21 = arith.constant dense<0.000000e+00> : vector<16x128xf32>
    %33 = tpu.matmul %29, %32, %cst_21 {dimension_numbers = #tpu.dot_dimension_numbers<[1], [0], [0], [1], [0, 0, 1, 1], [], []>} : vector<16x16xf32>, vector<16x128xf32>, vector<16x128xf32> -> vector<16x128xf32>
    %cst_22 = arith.constant 5.000000e-01 : f32
    %34 = vector.broadcast %cst_22 : f32 to vector<16x128xf32>
    %35 = arith.mulf %34, %15 : vector<16x128xf32>
    %36 = arith.addf %35, %33 : vector<16x128xf32>
    %c0_23 = arith.constant 0 : index
    %c0_24 = arith.constant 0 : index
    %37 = vector.load %arg6[%c0_23, %c0_24] : memref<128x256xf32, #tpu.memory_space<vmem>>, vector<128x256xf32>
    %cst_25 = arith.constant dense<0.000000e+00> : vector<16x256xf32>
    %38 = tpu.matmul %36, %37, %cst_25 {dimension_numbers = #tpu.dot_dimension_numbers<[1], [0], [0], [1], [0, 0, 1, 1], [], []>} : vector<16x128xf32>, vector<128x256xf32>, vector<16x256xf32> -> vector<16x256xf32>
    %39 = arith.mulf %0, %38 : vector<16x256xf32>
    %c0_26 = arith.constant 0 : index
    %c0_27 = arith.constant 0 : index
    %40 = vector.load %arg7[%c0_26, %c0_27] : memref<16x256xf32, #tpu.memory_space<vmem>>, vector<16x256xf32>
    tpu.vector_store %arg7[%c0_26, %c0_27], %39 {strides = array<i32>} : memref<16x256xf32, #tpu.memory_space<vmem>>, vector<16x256xf32>,
    return
  }
}

</mosaic_0001>

<llo_original>
// kernel: mlca_forward.1
$region0: #{mlca_forward.1}
  #allocation0 [shape = 'u32[]', space=smem, size = 0x4, offset = 0x4, fixed_abs, tag = 'smem constant byte address 0x4 - core index']
  #allocation1 [shape = 'u32[144,128]{1,0:T(1,128)}', space=vmem, size = 0x12000, scoped, tag = 'internal scratch']
  %s0 = inlined_call_operand.vmem [shape: f32[16,256], index: 0, kind: input, shape index: {}]
  %s1 = inlined_call_operand.vmem [shape: f32[256,384], index: 1, kind: input, shape index: {}]
  %s2 = inlined_call_operand.vmem [shape: f32[16,48], index: 2, kind: input, shape index: {}]
  %s3 = inlined_call_operand.vmem [shape: f32[16,16], index: 3, kind: input, shape index: {}]
  %s4 = inlined_call_operand.vmem [shape: f32[16,16], index: 4, kind: input, shape index: {}]
  %s5 = inlined_call_operand.vmem [shape: f32[16,128], index: 5, kind: input, shape index: {}]
  %s6 = inlined_call_operand.hbm [shape: f32[128,256], index: 6, kind: input, shape index: {}]
  %s7 = inlined_call_operand.vmem [shape: f32[16,256], index: 7, kind: output, shape index: {}]
  %s8 = sld [smem:[#allocation0]]
  $region42: #{mlca_forward.1} parent=0
    _
  %s10 = ssub.s32 1, %s8
  %s11 = scalar_select 0, %s10, %s8
  $region1: #{mlca_forward.1} parent=0
    #allocation2 [shape = 'u8[131072]{0}', space=vmem, size = 0x20000, scoped, tag = 'input window, operand 6, single buffered']
    #allocation3 [shape = 's32[1]{0}', space=sflag, size = 0x4, scoped, tag = 'scoped memory for mlca_forward.1']
    %12 = vsyncpa [#allocation3], 0
    // Predicated region
    $region2: #{mlca_forward.1} parent=1 // pred_check
      _
    $region3: #{mlca_forward.1} parent=1 // pred_check_branch
      %14 = sbr.rel (0) target = $region5
    $region4: #{mlca_forward.1} parent=1 // pred_region
      _
    $region5: #{mlca_forward.1} parent=1 // pred_fallthru
      _
    // Predicated region
    $region6: #{mlca_forward.1} parent=1 // pred_check
      _
    $region7: #{mlca_forward.1} parent=1 // pred_check_branch
      %16 = sbr.rel (0) target = $region9
    $region8: #{mlca_forward.1} parent=1 // pred_region
      _
    $region9: #{mlca_forward.1} parent=1 // pred_fallthru
      _
    // Predicated region
    $region10: #{mlca_forward.1} parent=1 // pred_check
      _
    $region11: #{mlca_forward.1} parent=1 // pred_check_branch
      %18 = sbr.rel (0) target = $region13
    $region12: #{mlca_forward.1} parent=1 // pred_region
      _
    $region13: #{mlca_forward.1} parent=1 // pred_fallthru
      _
    // Predicated region
    $region14: #{mlca_forward.1} parent=1 // pred_check
      _
    $region15: #{mlca_forward.1} parent=1 // pred_check_branch
      %20 = sbr.rel (0) target = $region17
    $region16: #{mlca_forward.1} parent=1 // pred_region
      _
    $region17: #{mlca_forward.1} parent=1 // pred_fallthru
      _
    // Predicated region
    $region18: #{mlca_forward.1} parent=1 // pred_check
      _
    $region19: #{mlca_forward.1} parent=1 // pred_check_branch
      %22 = sbr.rel (0) target = $region21
    $region20: #{mlca_forward.1} parent=1 // pred_region
      _
    $region21: #{mlca_forward.1} parent=1 // pred_fallthru
      _
    // Predicated region
    $region22: #{mlca_forward.1} parent=1 // pred_check
      _
    $region23: #{mlca_forward.1} parent=1 // pred_check_branch
      %24 = sbr.rel (0) target = $region25
    $region24: #{mlca_forward.1} parent=1 // pred_region
      _
    $region25: #{mlca_forward.1} parent=1 // pred_fallthru
      _
    // Predicated region
    $region26: #{mlca_forward.1} parent=1 // pred_check
      _
    $region27: #{mlca_forward.1} parent=1 // pred_check_branch
      %26 = sbr.rel (0) target = $region29
    $region28: #{mlca_forward.1} parent=1 // pred_region
      %s28 = ssub.s32 4096, 4096
      %29 = vsyncadd [#allocation3], %s28
      %s30 = sshll.u32 [#allocation2], 4
      %s31 = int_to_ptr.vmem [resolvable:$true] %s30
      %36 = dma.hbm_to_vmem [thread:$0]  %s6, 4096, %s31, [#allocation3], 256, 256, 16
    $region29: #{mlca_forward.1} parent=1 // pred_fallthru
      _
    // Predicated region
    $region30: #{mlca_forward.1} parent=1 // pred_check
      _
    $region31: #{mlca_forward.1} parent=1 // pred_check_branch
      %38 = sbr.rel (0) target = $region33
    $region32: #{mlca_forward.1} parent=1 // pred_region
      %39 = dma.done [#allocation3], 4096
    $region33: #{mlca_forward.1} parent=1 // pred_fallthru
      _
    %v40 = vld [vmem:[%s0] sm:$0xff]
    %v41 = vld [vmem:[%s0 + $0x8] sm:$0xff]
    %v42 = vld [vmem:[%s0 + $0x10] sm:$0xff]
    %v43 = vld [vmem:[%s0 + $0x18] sm:$0xff]
    %v44 = vld [vmem:[%s1] sm:$0xff]
    %v45 = vld [vmem:[%s1 + $0x8] sm:$0xff]
    %v46 = vld [vmem:[%s1 + $0x10] sm:$0xff]
    %v47 = vld [vmem:[%s1 + $0x18] sm:$0xff]
    %v48 = vld [vmem:[%s1 + $0x20] sm:$0xff]
    %v49 = vld [vmem:[%s1 + $0x28] sm:$0xff]
    %v50 = vld [vmem:[%s1 + $0x30] sm:$0xff]
    %v51 = vld [vmem:[%s1 + $0x38] sm:$0xff]
    %v52 = vld [vmem:[%s1 + $0x40] sm:$0xff]
    %v53 = vld [vmem:[%s1 + $0x48] sm:$0xff]
    %v54 = vld [vmem:[%s1 + $0x50] sm:$0xff]
    %v55 = vld [vmem:[%s1 + $0x58] sm:$0xff]
    %v56 = vld [vmem:[%s1 + $0x60] sm:$0xff]
    %v57 = vld [vmem:[%s1 + $0x68] sm:$0xff]
    %v58 = vld [vmem:[%s1 + $0x70] sm:$0xff]
    %v59 = vld [vmem:[%s1 + $0x78] sm:$0xff]
    %v60 = vld [vmem:[%s1 + $0x80] sm:$0xff]
    %v61 = vld [vmem:[%s1 + $0x88] sm:$0xff]
    %v62 = vld [vmem:[%s1 + $0x90] sm:$0xff]
    %v63 = vld [vmem:[%s1 + $0x98] sm:$0xff]
    %v64 = vld [vmem:[%s1 + $0xa0] sm:$0xff]
    %v65 = vld [vmem:[%s1 + $0xa8] sm:$0xff]
    %v66 = vld [vmem:[%s1 + $0xb0] sm:$0xff]
    %v67 = vld [vmem:[%s1 + $0xb8] sm:$0xff]
    %v68 = vld [vmem:[%s1 + $0xc0] sm:$0xff]
    %v69 = vld [vmem:[%s1 + $0xc8] sm:$0xff]
    %v70 = vld [vmem:[%s1 + $0xd0] sm:$0xff]
    %v71 = vld [vmem:[%s1 + $0xd8] sm:$0xff]
    %v72 = vld [vmem:[%s1 + $0xe0] sm:$0xff]
    %v73 = vld [vmem:[%s1 + $0xe8] sm:$0xff]
    %v74 = vld [vmem:[%s1 + $0xf0] sm:$0xff]
    %v75 = vld [vmem:[%s1 + $0xf8] sm:$0xff]
    %v76 = vld [vmem:[%s1 + $0x100] sm:$0xff]
    %v77 = vld [vmem:[%s1 + $0x108] sm:$0xff]
    %v78 = vld [vmem:[%s1 + $0x110] sm:$0xff]
    %v79 = vld [vmem:[%s1 + $0x118] sm:$0xff]
    %v80 = vld [vmem:[%s1 + $0x120] sm:$0xff]
    %v81 = vld [vmem:[%s1 + $0x128] sm:$0xff]
    %v82 = vld [vmem:[%s1 + $0x130] sm:$0xff]
    %v83 = vld [vmem:[%s1 + $0x138] sm:$0xff]
    %v84 = vld [vmem:[%s1 + $0x140] sm:$0xff]
    %v85 = vld [vmem:[%s1 + $0x148] sm:$0xff]
    %v86 = vld [vmem:[%s1 + $0x150] sm:$0xff]
    %v87 = vld [vmem:[%s1 + $0x158] sm:$0xff]
    %v88 = vld [vmem:[%s1 + $0x160] sm:$0xff]
    %v89 = vld [vmem:[%s1 + $0x168] sm:$0xff]
    %v90 = vld [vmem:[%s1 + $0x170] sm:$0xff]
    %v91 = vld [vmem:[%s1 + $0x178] sm:$0xff]
    %v92 = vld [vmem:[%s1 + $0x180] sm:$0xff]
    %v93 = vld [vmem:[%s1 + $0x188] sm:$0xff]
    %v94 = vld [vmem:[%s1 + $0x190] sm:$0xff]
    %v95 = vld [vmem:[%s1 + $0x198] sm:$0xff]
    %v96 = vld [vmem:[%s1 + $0x1a0] sm:$0xff]
    %v97 = vld [vmem:[%s1 + $0x1a8] sm:$0xff]
    %v98 = vld [vmem:[%s1 + $0x1b0] sm:$0xff]
    %v99 = vld [vmem:[%s1 + $0x1b8] sm:$0xff]
    %v100 = vld [vmem:[%s1 + $0x1c0] sm:$0xff]
    %v101 = vld [vmem:[%s1 + $0x1c8] sm:$0xff]
    %v102 = vld [vmem:[%s1 + $0x1d0] sm:$0xff]
    %v103 = vld [vmem:[%s1 + $0x1d8] sm:$0xff]
    %v104 = vld [vmem:[%s1 + $0x1e0] sm:$0xff]
    %v105 = vld [vmem:[%s1 + $0x1e8] sm:$0xff]
    %v106 = vld [vmem:[%s1 + $0x1f0] sm:$0xff]
    %v107 = vld [vmem:[%s1 + $0x1f8] sm:$0xff]
    %v108 = vld [vmem:[%s1 + $0x200] sm:$0xff]
    %v109 = vld [vmem:[%s1 + $0x208] sm:$0xff]
    %v110 = vld [vmem:[%s1 + $0x210] sm:$0xff]
    %v111 = vld [vmem:[%s1 + $0x218] sm:$0xff]
    %v112 = vld [vmem:[%s1 + $0x220] sm:$0xff]
    %v113 = vld [vmem:[%s1 + $0x228] sm:$0xff]
    %v114 = vld [vmem:[%s1 + $0x230] sm:$0xff]
    %v115 = vld [vmem:[%s1 + $0x238] sm:$0xff]
    %v116 = vld [vmem:[%s1 + $0x240] sm:$0xff]
    %v117 = vld [vmem:[%s1 + $0x248] sm:$0xff]
    %v118 = vld [vmem:[%s1 + $0x250] sm:$0xff]
    %v119 = vld [vmem:[%s1 + $0x258] sm:$0xff]
    %v120 = vld [vmem:[%s1 + $0x260] sm:$0xff]
    %v121 = vld [vmem:[%s1 + $0x268] sm:$0xff]
    %v122 = vld [vmem:[%s1 + $0x270] sm:$0xff]
    %v123 = vld [vmem:[%s1 + $0x278] sm:$0xff]
    %v124 = vld [vmem:[%s1 + $0x280] sm:$0xff]
    %v125 = vld [vmem:[%s1 + $0x288] sm:$0xff]
    %v126 = vld [vmem:[%s1 + $0x290] sm:$0xff]
    %v127 = vld [vmem:[%s1 + $0x298] sm:$0xff]
    %v128 = vld [vmem:[%s1 + $0x2a0] sm:$0xff]
    %v129 = vld [vmem:[%s1 + $0x2a8] sm:$0xff]
    %v130 = vld [vmem:[%s1 + $0x2b0] sm:$0xff]
    %v131 = vld [vmem:[%s1 + $0x2b8] sm:$0xff]
    %v132 = vld [vmem:[%s1 + $0x2c0] sm:$0xff]
    %v133 = vld [vmem:[%s1 + $0x2c8] sm:$0xff]
    %v134 = vld [vmem:[%s1 + $0x2d0] sm:$0xff]
    %v135 = vld [vmem:[%s1 + $0x2d8] sm:$0xff]
    %v136 = vld [vmem:[%s1 + $0x2e0] sm:$0xff]
    %v137 = vld [vmem:[%s1 + $0x2e8] sm:$0xff]
    %v138 = vld [vmem:[%s1 + $0x2f0] sm:$0xff]
    %v139 = vld [vmem:[%s1 + $0x2f8] sm:$0xff]
    %140 = vmatprep.subr.mxu0 %v45
    %141 = vmatpush1.msra.mxu0 %v44
    %142 = vmatprep.subr.mxu0 %v48
    %143 = vmatpush1.msra.mxu0 %v47
    %144 = vmatprep.subr.mxu0 %v51
    %145 = vmatpush1.msra.mxu0 %v50
    %146 = vmatprep.subr.mxu0 %v54
    %147 = vmatpush1.msra.mxu0 %v53
    %148 = vmatprep.subr.mxu0 %v57
    %149 = vmatpush1.msra.mxu0 %v56
    %150 = vmatprep.subr.mxu0 %v60
    %151 = vmatpush1.msra.mxu0 %v59
    %152 = vmatprep.subr.mxu0 %v63
    %153 = vmatpush1.msra.mxu0 %v62
    %154 = vmatprep.subr.mxu0 %v66
    %155 = vmatpush1.msra.mxu0 %v65
    %156 = vmatprep.subr.mxu0 %v69
    %157 = vmatpush1.msra.mxu0 %v68
    %158 = vmatprep.subr.mxu0 %v72
    %159 = vmatpush1.msra.mxu0 %v71
    %160 = vmatprep.subr.mxu0 %v75
    %161 = vmatpush1.msra.mxu0 %v74
    %162 = vmatprep.subr.mxu0 %v78
    %163 = vmatpush1.msra.mxu0 %v77
    %164 = vmatprep.subr.mxu0 %v81
    %165 = vmatpush1.msra.mxu0 %v80
    %166 = vmatprep.subr.mxu0 %v84
    %167 = vmatpush1.msra.mxu0 %v83
    %168 = vmatprep.subr.mxu0 %v87
    %169 = vmatpush1.msra.mxu0 %v86
    %170 = vmatprep.subr.mxu0 %v90
    %171 = vmatpush1.msra.mxu0 %v89
    %172 = vmatprep.subr.mxu0 %v93
    %173 = vmatpush1.msra.mxu0 %v92
    %174 = vmatprep.subr.mxu0 %v96
    %175 = vmatpush1.msra.mxu0 %v95
    %176 = vmatprep.subr.mxu0 %v99
    %177 = vmatpush1.msra.mxu0 %v98
    %178 = vmatprep.subr.mxu0 %v102
    %179 = vmatpush1.msra.mxu0 %v101
    %180 = vmatprep.subr.mxu0 %v105
    %181 = vmatpush1.msra.mxu0 %v104
    %182 = vmatprep.subr.mxu0 %v108
    %183 = vmatpush1.msra.mxu0 %v107
    %184 = vmatprep.subr.mxu0 %v111
    %185 = vmatpush1.msra.mxu0 %v110
    %186 = vmatprep.subr.mxu0 %v114
    %187 = vmatpush1.msra.mxu0 %v113
    %188 = vmatprep.subr.mxu0 %v117
    %189 = vmatpush1.msra.mxu0 %v116
    %190 = vmatprep.subr.mxu0 %v120
    %191 = vmatpush1.msra.mxu0 %v119
    %192 = vmatprep.subr.mxu0 %v123
    %193 = vmatpush1.msra.mxu0 %v122
    %194 = vmatprep.subr.mxu0 %v126
    %195 = vmatpush1.msra.mxu0 %v125
    %196 = vmatprep.subr.mxu0 %v129
    %197 = vmatpush1.msra.mxu0 %v128
    %198 = vmatprep.subr.mxu0 %v132
    %199 = vmatpush1.msra.mxu0 %v131
    %200 = vmatprep.subr.mxu0 %v135
    %201 = vmatpush1.msra.mxu0 %v134
    %202 = vmatprep.subr.mxu0 %v138
    %203 = vmatpush1.msra.mxu0 %v137
    %204 = vmatprep.mubr.f32.mxu0 %v41
    %205 = vmatmul.mubr.f32.gmra.mrb[0].mxu0 %v40
    %v206 = vpop.f32.mrb[0].mxu0
    %v207 = vadd.f32 0.0, %v206
    %v208 = vpop.f32.mrb[0].mxu0
    %v209 = vadd.f32 0.0, %v208
    %210 = vmatprep.mubr.f32.mxu0 %v43
    %211 = vmatmul.mubr.f32.gmra.mrb[0].mxu0 %v42
    %v212 = vpop.f32.mrb[0].mxu0
    %v213 = vadd.f32 0.0, %v212
    %v214 = vpop.f32.mrb[0].mxu0
    %v215 = vadd.f32 0.0, %v214
    %216 = vdwg.mxu0
    %217 = vmatprep.subr.mxu0 0.0
    %218 = vmatpush1.msra.mxu0 %v46
    %219 = vmatprep.subr.mxu0 0.0
    %220 = vmatpush1.msra.mxu0 %v49
    %221 = vmatprep.subr.mxu0 0.0
    %222 = vmatpush1.msra.mxu0 %v52
    %223 = vmatprep.subr.mxu0 0.0
    %224 = vmatpush1.msra.mxu0 %v55
    %225 = vmatprep.subr.mxu0 0.0
    %226 = vmatpush1.msra.mxu0 %v58
    %227 = vmatprep.subr.mxu0 0.0
    %228 = vmatpush1.msra.mxu0 %v61
    %229 = vmatprep.subr.mxu0 0.0
    %230 = vmatpush1.msra.mxu0 %v64
    %231 = vmatprep.subr.mxu0 0.0
    %232 = vmatpush1.msra.mxu0 %v67
    %233 = vmatprep.subr.mxu0 0.0
    %234 = vmatpush1.msra.mxu0 %v70
    %235 = vmatprep.subr.mxu0 0.0
    %236 = vmatpush1.msra.mxu0 %v73
    %237 = vmatprep.subr.mxu0 0.0
    %238 = vmatpush1.msra.mxu0 %v76
    %239 = vmatprep.subr.mxu0 0.0
    %240 = vmatpush1.msra.mxu0 %v79
    %241 = vmatprep.subr.mxu0 0.0
    %242 = vmatpush1.msra.mxu0 %v82
    %243 = vmatprep.subr.mxu0 0.0
    %244 = vmatpush1.msra.mxu0 %v85
    %245 = vmatprep.subr.mxu0 0.0
    %246 = vmatpush1.msra.mxu0 %v88
    %247 = vmatprep.subr.mxu0 0.0
    %248 = vmatpush1.msra.mxu0 %v91
    %249 = vmatprep.subr.mxu0 0.0
    %250 = vmatpush1.msra.mxu0 %v94
    %251 = vmatprep.subr.mxu0 0.0
    %252 = vmatpush1.msra.mxu0 %v97
    %253 = vmatprep.subr.mxu0 0.0
    %254 = vmatpush1.msra.mxu0 %v100
    %255 = vmatprep.subr.mxu0 0.0
    %256 = vmatpush1.msra.mxu0 %v103
    %257 = vmatprep.subr.mxu0 0.0
    %258 = vmatpush1.msra.mxu0 %v106
    %259 = vmatprep.subr.mxu0 0.0
    %260 = vmatpush1.msra.mxu0 %v109
    %261 = vmatprep.subr.mxu0 0.0
    %262 = vmatpush1.msra.mxu0 %v112
    %263 = vmatprep.subr.mxu0 0.0
    %264 = vmatpush1.msra.mxu0 %v115
    %265 = vmatprep.subr.mxu0 0.0
    %266 = vmatpush1.msra.mxu0 %v118
    %267 = vmatprep.subr.mxu0 0.0
    %268 = vmatpush1.msra.mxu0 %v121
    %269 = vmatprep.subr.mxu0 0.0
    %270 = vmatpush1.msra.mxu0 %v124
    %271 = vmatprep.subr.mxu0 0.0
    %272 = vmatpush1.msra.mxu0 %v127
    %273 = vmatprep.subr.mxu0 0.0
    %274 = vmatpush1.msra.mxu0 %v130
    %275 = vmatprep.subr.mxu0 0.0
    %276 = vmatpush1.msra.mxu0 %v133
    %277 = vmatprep.subr.mxu0 0.0
    %278 = vmatpush1.msra.mxu0 %v136
    %279 = vmatprep.subr.mxu0 0.0
    %280 = vmatpush1.msra.mxu0 %v139
    %281 = vmatprep.mubr.f32.mxu0 %v41
    %282 = vmatmul.mubr.f32.gmra.mrb[0].mxu0 %v40
    %v283 = vpop.f32.mrb[0].mxu0
    %v284 = vadd.f32 0.0, %v283
    %v285 = vpop.f32.mrb[0].mxu0
    %286 = vmatprep.mubr.f32.mxu0 %v43
    %287 = vmatmul.mubr.f32.gmra.mrb[0].mxu0 %v42
    %v288 = vpop.f32.mrb[0].mxu0
    %v289 = vadd.f32 0.0, %v288
    %v290 = vpop.f32.mrb[0].mxu0
    %291 = vdwg.mxu0
    %v292 = vld [vmem:[%s2] sm:$0xff]
    %v293 = vld [vmem:[%s2 + $0x8] sm:$0xff]
    %vm294 = vcmask 392192
    %v296 = vsel %vm294, %v292, 0
    %v299 = vsel %vm294, %v293, 0
    %301 = vmatprep.subr.mxu0 0.0
    %302 = vmatpush1.msra.mxu0 %v207
    %303 = vmatprep.subr.mxu0 0.0
    %304 = vmatpush1.msra.mxu0 %v213
    %305 = vmatprep.subr.mxu0 0.0
    %306 = vmatpush1.msra.mxu0 %v209
    %307 = vmatprep.subr.mxu0 0.0
    %308 = vmatpush1.msra.mxu0 %v215
    %309 = vmatprep.subr.mxu0 0.0
    %310 = vmatpush1.msra.mxu0 %v284
    %311 = vmatprep.subr.mxu0 0.0
    %312 = vmatpush1.msra.mxu0 %v289
    %313 = vmatprep.subr.mxu0 0.0
    %314 = vmatpush1.msra.mxu0 0.0
    %315 = vmatprep.subr.mxu0 0.0
    %316 = vmatpush1.msra.mxu0 0.0
    %317 = vmatprep.subr.mxu0 0.0
    %318 = vmatpush1.msra.mxu0 0.0
    %319 = vmatprep.subr.mxu0 0.0
    %320 = vmatpush1.msra.mxu0 0.0
    %321 = vmatprep.subr.mxu0 0.0
    %322 = vmatpush1.msra.mxu0 0.0
    %323 = vmatprep.subr.mxu0 0.0
    %324 = vmatpush1.msra.mxu0 0.0
    %325 = vmatprep.subr.mxu0 0.0
    %326 = vmatpush1.msra.mxu0 0.0
    %327 = vmatprep.subr.mxu0 0.0
    %328 = vmatpush1.msra.mxu0 0.0
    %329 = vmatprep.subr.mxu0 0.0
    %330 = vmatpush1.msra.mxu0 0.0
    %331 = vmatprep.subr.mxu0 0.0
    %332 = vmatpush1.msra.mxu0 0.0
    %333 = vmatprep.subr.mxu0 0.0
    %334 = vmatpush1.msra.mxu0 0.0
    %335 = vmatprep.subr.mxu0 0.0
    %336 = vmatpush1.msra.mxu0 0.0
    %337 = vmatprep.subr.mxu0 0.0
    %338 = vmatpush1.msra.mxu0 0.0
    %339 = vmatprep.subr.mxu0 0.0
    %340 = vmatpush1.msra.mxu0 0.0
    %341 = vmatprep.subr.mxu0 0.0
    %342 = vmatpush1.msra.mxu0 0.0
    %343 = vmatprep.subr.mxu0 0.0
    %344 = vmatpush1.msra.mxu0 0.0
    %345 = vmatprep.subr.mxu0 0.0
    %346 = vmatpush1.msra.mxu0 0.0
    %347 = vmatprep.subr.mxu0 0.0
    %348 = vmatpush1.msra.mxu0 0.0
    %349 = vmatprep.subr.mxu0 0.0
    %350 = vmatpush1.msra.mxu0 0.0
    %351 = vmatprep.subr.mxu0 0.0
    %352 = vmatpush1.msra.mxu0 0.0
    %353 = vmatprep.subr.mxu0 0.0
    %354 = vmatpush1.msra.mxu0 0.0
    %355 = vmatprep.subr.mxu0 0.0
    %356 = vmatpush1.msra.mxu0 0.0
    %357 = vmatprep.subr.mxu0 0.0
    %358 = vmatpush1.msra.mxu0 0.0
    %359 = vmatprep.subr.mxu0 0.0
    %360 = vmatpush1.msra.mxu0 0.0
    %361 = vmatprep.subr.mxu0 0.0
    %362 = vmatpush1.msra.mxu0 0.0
    %363 = vmatprep.subr.mxu0 0.0
    %364 = vmatpush1.msra.mxu0 0.0
    %365 = vmatprep.mubr.f32.mxu0 0.0
    %366 = vmatmul.mubr.f32.gmra.mrb[0].mxu0 %v296
    %v367 = vpop.f32.mrb[0].mxu0
    %v368 = vadd.f32 0.0, %v367
    %v369 = vpop.f32.mrb[0].mxu0
    %370 = vmatprep.mubr.f32.mxu0 0.0
    %371 = vmatmul.mubr.f32.gmra.mrb[0].mxu0 %v299
    %v372 = vpop.f32.mrb[0].mxu0
    %v373 = vadd.f32 0.0, %v372
    %v374 = vpop.f32.mrb[0].mxu0
    %375 = vdwg.mxu0
    %v376 = vmul.f32 %v368, 0.5
    %v377 = vmul.f32 %v373, 0.5
    %v378 = vtanh.pop %v376
    %v379 = vtanh.pop %v377
    %v380 = vmul.f32 %v378, 0.5
    %v381 = vmul.f32 %v379, 0.5
    %v382 = vadd.f32 %v380, 0.5
    %v383 = vadd.f32 %v381, 0.5
    %v384 = vld [vmem:[%s3] sm:$0xff]
    %v385 = vld [vmem:[%s3 + $0x8] sm:$0xff]
    %vm386 = vcmask 130048
    %v388 = vsel %vm386, %v384, 0
    %v391 = vsel %vm386, %v385, 0
    %393 = vmatprep.subr.mxu0 0.0
    %394 = vmatpush1.msra.mxu0 %v207
    %395 = vmatprep.subr.mxu0 0.0
    %396 = vmatpush1.msra.mxu0 %v213
    %397 = vmatprep.subr.mxu0 0.0
    %398 = vmatpush1.msra.mxu0 0.0
    %399 = vmatprep.subr.mxu0 0.0
    %400 = vmatpush1.msra.mxu0 0.0
    %401 = vmatprep.subr.mxu0 0.0
    %402 = vmatpush1.msra.mxu0 0.0
    %403 = vmatprep.subr.mxu0 0.0
    %404 = vmatpush1.msra.mxu0 0.0
    %405 = vmatprep.subr.mxu0 0.0
    %406 = vmatpush1.msra.mxu0 0.0
    %407 = vmatprep.subr.mxu0 0.0
    %408 = vmatpush1.msra.mxu0 0.0
    %409 = vmatprep.subr.mxu0 0.0
    %410 = vmatpush1.msra.mxu0 0.0
    %411 = vmatprep.subr.mxu0 0.0
    %412 = vmatpush1.msra.mxu0 0.0
    %413 = vmatprep.subr.mxu0 0.0
    %414 = vmatpush1.msra.mxu0 0.0
    %415 = vmatprep.subr.mxu0 0.0
    %416 = vmatpush1.msra.mxu0 0.0
    %417 = vmatprep.subr.mxu0 0.0
    %418 = vmatpush1.msra.mxu0 0.0
    %419 = vmatprep.subr.mxu0 0.0
    %420 = vmatpush1.msra.mxu0 0.0
    %421 = vmatprep.subr.mxu0 0.0
    %422 = vmatpush1.msra.mxu0 0.0
    %423 = vmatprep.subr.mxu0 0.0
    %424 = vmatpush1.msra.mxu0 0.0
    %425 = vmatprep.subr.mxu0 0.0
    %426 = vmatpush1.msra.mxu0 0.0
    %427 = vmatprep.subr.mxu0 0.0
    %428 = vmatpush1.msra.mxu0 0.0
    %429 = vmatprep.subr.mxu0 0.0
    %430 = vmatpush1.msra.mxu0 0.0
    %431 = vmatprep.subr.mxu0 0.0
    %432 = vmatpush1.msra.mxu0 0.0
    %433 = vmatprep.subr.mxu0 0.0
    %434 = vmatpush1.msra.mxu0 0.0
    %435 = vmatprep.subr.mxu0 0.0
    %436 = vmatpush1.msra.mxu0 0.0
    %437 = vmatprep.subr.mxu0 0.0
    %438 = vmatpush1.msra.mxu0 0.0
    %439 = vmatprep.subr.mxu0 0.0
    %440 = vmatpush1.msra.mxu0 0.0
    %441 = vmatprep.subr.mxu0 0.0
    %442 = vmatpush1.msra.mxu0 0.0
    %443 = vmatprep.subr.mxu0 0.0
    %444 = vmatpush1.msra.mxu0 0.0
    %445 = vmatprep.subr.mxu0 0.0
    %446 = vmatpush1.msra.mxu0 0.0
    %447 = vmatprep.subr.mxu0 0.0
    %448 = vmatpush1.msra.mxu0 0.0
    %449 = vmatprep.subr.mxu0 0.0
    %450 = vmatpush1.msra.mxu0 0.0
    %451 = vmatprep.subr.mxu0 0.0
    %452 = vmatpush1.msra.mxu0 0.0
    %453 = vmatprep.subr.mxu0 0.0
    %454 = vmatpush1.msra.mxu0 0.0
    %455 = vmatprep.subr.mxu0 0.0
    %456 = vmatpush1.msra.mxu0 0.0
    %457 = vmatprep.mubr.f32.mxu0 0.0
    %458 = vmatmul.mubr.f32.gmra.mrb[0].mxu0 %v388
    %v459 = vpop.f32.mrb[0].mxu0
    %v460 = vadd.f32 0.0, %v459
    %v461 = vpop.f32.mrb[0].mxu0
    %462 = vmatprep.mubr.f32.mxu0 0.0
    %463 = vmatmul.mubr.f32.gmra.mrb[0].mxu0 %v391
    %v464 = vpop.f32.mrb[0].mxu0
    %v465 = vadd.f32 0.0, %v464
    %v466 = vpop.f32.mrb[0].mxu0
    %467 = vdwg.mxu0
    %468 = vadd.xlane.f32.xlu0 %v460
    %v469 = vpop.xlane.xlu0 %468
    %470 = vadd.xlane.f32.xlu0 %v465
    %v471 = vpop.xlane.xlu0 %470
    %v472 = vmul.f32 %v469, 0.04
    %v473 = vmul.f32 %v471, 0.04
    %v474 = vmul.f32 %v472, 0.5
    %v475 = vmul.f32 %v473, 0.5
    %v476 = vtanh.pop %v474
    %v477 = vtanh.pop %v475
    %v478 = vmul.f32 %v476, 0.5
    %v479 = vmul.f32 %v477, 0.5
    %v480 = vadd.f32 %v478, 0.5
    %v481 = vadd.f32 %v479, 0.5
    %v482 = vld [vmem:[%s4] sm:$0xff]
    %v483 = vld [vmem:[%s4 + $0x8] sm:$0xff]
    %v484 = vld [vmem:[%s5] sm:$0xff]
    %v485 = vld [vmem:[%s5 + $0x8] sm:$0xff]
    %v486 = vmul.f32 %v480, %v484
    %v487 = vmul.f32 %v481, %v485
    %v489 = vsel %vm386, %v482, 0
    %v492 = vsel %vm386, %v483, 0
    %494 = vmatprep.subr.mxu0 0.0
    %495 = vmatpush1.msra.mxu0 %v486
    %496 = vmatprep.subr.mxu0 0.0
    %497 = vmatpush1.msra.mxu0 %v487
    %498 = vmatprep.subr.mxu0 0.0
    %499 = vmatpush1.msra.mxu0 0.0
    %500 = vmatprep.subr.mxu0 0.0
    %501 = vmatpush1.msra.mxu0 0.0
    %502 = vmatprep.subr.mxu0 0.0
    %503 = vmatpush1.msra.mxu0 0.0
    %504 = vmatprep.subr.mxu0 0.0
    %505 = vmatpush1.msra.mxu0 0.0
    %506 = vmatprep.subr.mxu0 0.0
    %507 = vmatpush1.msra.mxu0 0.0
    %508 = vmatprep.subr.mxu0 0.0
    %509 = vmatpush1.msra.mxu0 0.0
    %510 = vmatprep.subr.mxu0 0.0
    %511 = vmatpush1.msra.mxu0 0.0
    %512 = vmatprep.subr.mxu0 0.0
    %513 = vmatpush1.msra.mxu0 0.0
    %514 = vmatprep.subr.mxu0 0.0
    %515 = vmatpush1.msra.mxu0 0.0
    %516 = vmatprep.subr.mxu0 0.0
    %517 = vmatpush1.msra.mxu0 0.0
    %518 = vmatprep.subr.mxu0 0.0
    %519 = vmatpush1.msra.mxu0 0.0
    %520 = vmatprep.subr.mxu0 0.0
    %521 = vmatpush1.msra.mxu0 0.0
    %522 = vmatprep.subr.mxu0 0.0
    %523 = vmatpush1.msra.mxu0 0.0
    %524 = vmatprep.subr.mxu0 0.0
    %525 = vmatpush1.msra.mxu0 0.0
    %526 = vmatprep.subr.mxu0 0.0
    %527 = vmatpush1.msra.mxu0 0.0
    %528 = vmatprep.subr.mxu0 0.0
    %529 = vmatpush1.msra.mxu0 0.0
    %530 = vmatprep.subr.mxu0 0.0
    %531 = vmatpush1.msra.mxu0 0.0
    %532 = vmatprep.subr.mxu0 0.0
    %533 = vmatpush1.msra.mxu0 0.0
    %534 = vmatprep.subr.mxu0 0.0
    %535 = vmatpush1.msra.mxu0 0.0
    %536 = vmatprep.subr.mxu0 0.0
    %537 = vmatpush1.msra.mxu0 0.0
    %538 = vmatprep.subr.mxu0 0.0
    %539 = vmatpush1.msra.mxu0 0.0
    %540 = vmatprep.subr.mxu0 0.0
    %541 = vmatpush1.msra.mxu0 0.0
    %542 = vmatprep.subr.mxu0 0.0
    %543 = vmatpush1.msra.mxu0 0.0
    %544 = vmatprep.subr.mxu0 0.0
    %545 = vmatpush1.msra.mxu0 0.0
    %546 = vmatprep.subr.mxu0 0.0
    %547 = vmatpush1.msra.mxu0 0.0
    %548 = vmatprep.subr.mxu0 0.0
    %549 = vmatpush1.msra.mxu0 0.0
    %550 = vmatprep.subr.mxu0 0.0
    %551 = vmatpush1.msra.mxu0 0.0
    %552 = vmatprep.subr.mxu0 0.0
    %553 = vmatpush1.msra.mxu0 0.0
    %554 = vmatprep.subr.mxu0 0.0
    %555 = vmatpush1.msra.mxu0 0.0
    %556 = vmatprep.subr.mxu0 0.0
    %557 = vmatpush1.msra.mxu0 0.0
    %558 = vmatprep.mubr.f32.mxu0 0.0
    %559 = vmatmul.mubr.f32.gmra.mrb[0].mxu0 %v489
    %v560 = vpop.f32.mrb[0].mxu0
    %v561 = vadd.f32 0.0, %v560
    %v562 = vpop.f32.mrb[0].mxu0
    %563 = vmatprep.mubr.f32.mxu0 0.0
    %564 = vmatmul.mubr.f32.gmra.mrb[0].mxu0 %v492
    %v565 = vpop.f32.mrb[0].mxu0
    %v566 = vadd.f32 0.0, %v565
    %v567 = vpop.f32.mrb[0].mxu0
    %568 = vdwg.mxu0
    %v569 = vmul.f32 %v382, 0.5
    %v570 = vmul.f32 %v383, 0.5
    %v571 = vadd.f32 %v569, %v561
    %v572 = vadd.f32 %v570, %v566
    %v573 = vld [vmem:[#allocation2] sm:$0xff]
    %v574 = vld [vmem:[#allocation2 + $0x8] sm:$0xff]
    %v575 = vld [vmem:[#allocation2 + $0x10] sm:$0xff]
    %v576 = vld [vmem:[#allocation2 + $0x18] sm:$0xff]
    %v577 = vld [vmem:[#allocation2 + $0x20] sm:$0xff]
    %v578 = vld [vmem:[#allocation2 + $0x28] sm:$0xff]
    %v579 = vld [vmem:[#allocation2 + $0x30] sm:$0xff]
    %v580 = vld [vmem:[#allocation2 + $0x38] sm:$0xff]
    %v581 = vld [vmem:[#allocation2 + $0x40] sm:$0xff]
    %v582 = vld [vmem:[#allocation2 + $0x48] sm:$0xff]
    %v583 = vld [vmem:[#allocation2 + $0x50] sm:$0xff]
    %v584 = vld [vmem:[#allocation2 + $0x58] sm:$0xff]
    %v585 = vld [vmem:[#allocation2 + $0x60] sm:$0xff]
    %v586 = vld [vmem:[#allocation2 + $0x68] sm:$0xff]
    %v587 = vld [vmem:[#allocation2 + $0x70] sm:$0xff]
    %v588 = vld [vmem:[#allocation2 + $0x78] sm:$0xff]
    %v589 = vld [vmem:[#allocation2 + $0x80] sm:$0xff]
    %v590 = vld [vmem:[#allocation2 + $0x88] sm:$0xff]
    %v591 = vld [vmem:[#allocation2 + $0x90] sm:$0xff]
    %v592 = vld [vmem:[#allocation2 + $0x98] sm:$0xff]
    %v593 = vld [vmem:[#allocation2 + $0xa0] sm:$0xff]
    %v594 = vld [vmem:[#allocation2 + $0xa8] sm:$0xff]
    %v595 = vld [vmem:[#allocation2 + $0xb0] sm:$0xff]
    %v596 = vld [vmem:[#allocation2 + $0xb8] sm:$0xff]
    %v597 = vld [vmem:[#allocation2 + $0xc0] sm:$0xff]
    %v598 = vld [vmem:[#allocation2 + $0xc8] sm:$0xff]
    %v599 = vld [vmem:[#allocation2 + $0xd0] sm:$0xff]
    %v600 = vld [vmem:[#allocation2 + $0xd8] sm:$0xff]
    %v601 = vld [vmem:[#allocation2 + $0xe0] sm:$0xff]
    %v602 = vld [vmem:[#allocation2 + $0xe8] sm:$0xff]
    %v603 = vld [vmem:[#allocation2 + $0xf0] sm:$0xff]
    %v604 = vld [vmem:[#allocation2 + $0xf8] sm:$0xff]
    %605 = vmatprep.subr.mxu0 %v574
    %606 = vmatpush1.msra.mxu0 %v573
    %607 = vmatprep.subr.mxu0 %v576
    %608 = vmatpush1.msra.mxu0 %v575
    %609 = vmatprep.subr.mxu0 %v578
    %610 = vmatpush1.msra.mxu0 %v577
    %611 = vmatprep.subr.mxu0 %v580
    %612 = vmatpush1.msra.mxu0 %v579
    %613 = vmatprep.subr.mxu0 %v582
    %614 = vmatpush1.msra.mxu0 %v581
    %615 = vmatprep.subr.mxu0 %v584
    %616 = vmatpush1.msra.mxu0 %v583
    %617 = vmatprep.subr.mxu0 %v586
    %618 = vmatpush1.msra.mxu0 %v585
    %619 = vmatprep.subr.mxu0 %v588
    %620 = vmatpush1.msra.mxu0 %v587
    %621 = vmatprep.subr.mxu0 %v590
    %622 = vmatpush1.msra.mxu0 %v589
    %623 = vmatprep.subr.mxu0 %v592
    %624 = vmatpush1.msra.mxu0 %v591
    %625 = vmatprep.subr.mxu0 %v594
    %626 = vmatpush1.msra.mxu0 %v593
    %627 = vmatprep.subr.mxu0 %v596
    %628 = vmatpush1.msra.mxu0 %v595
    %629 = vmatprep.subr.mxu0 %v598
    %630 = vmatpush1.msra.mxu0 %v597
    %631 = vmatprep.subr.mxu0 %v600
    %632 = vmatpush1.msra.mxu0 %v599
    %633 = vmatprep.subr.mxu0 %v602
    %634 = vmatpush1.msra.mxu0 %v601
    %635 = vmatprep.subr.mxu0 %v604
    %636 = vmatpush1.msra.mxu0 %v603
    %637 = vmatprep.subr.mxu0 0.0
    %638 = vmatpush1.msra.mxu0 0.0
    %639 = vmatprep.subr.mxu0 0.0
    %640 = vmatpush1.msra.mxu0 0.0
    %641 = vmatprep.subr.mxu0 0.0
    %642 = vmatpush1.msra.mxu0 0.0
    %643 = vmatprep.subr.mxu0 0.0
    %644 = vmatpush1.msra.mxu0 0.0
    %645 = vmatprep.subr.mxu0 0.0
    %646 = vmatpush1.msra.mxu0 0.0
    %647 = vmatprep.subr.mxu0 0.0
    %648 = vmatpush1.msra.mxu0 0.0
    %649 = vmatprep.subr.mxu0 0.0
    %650 = vmatpush1.msra.mxu0 0.0
    %651 = vmatprep.subr.mxu0 0.0
    %652 = vmatpush1.msra.mxu0 0.0
    %653 = vmatprep.subr.mxu0 0.0
    %654 = vmatpush1.msra.mxu0 0.0
    %655 = vmatprep.subr.mxu0 0.0
    %656 = vmatpush1.msra.mxu0 0.0
    %657 = vmatprep.subr.mxu0 0.0
    %658 = vmatpush1.msra.mxu0 0.0
    %659 = vmatprep.subr.mxu0 0.0
    %660 = vmatpush1.msra.mxu0 0.0
    %661 = vmatprep.subr.mxu0 0.0
    %662 = vmatpush1.msra.mxu0 0.0
    %663 = vmatprep.subr.mxu0 0.0
    %664 = vmatpush1.msra.mxu0 0.0
    %665 = vmatprep.subr.mxu0 0.0
    %666 = vmatpush1.msra.mxu0 0.0
    %667 = vmatprep.subr.mxu0 0.0
    %668 = vmatpush1.msra.mxu0 0.0
    %669 = vmatprep.mubr.f32.mxu0 0.0
    %670 = vmatmul.mubr.f32.gmra.mrb[0].mxu0 %v571
    %v671 = vpop.f32.mrb[0].mxu0
    %v672 = vadd.f32 0.0, %v671
    %v673 = vpop.f32.mrb[0].mxu0
    %v674 = vadd.f32 0.0, %v673
    %675 = vmatprep.mubr.f32.mxu0 0.0
    %676 = vmatmul.mubr.f32.gmra.mrb[0].mxu0 %v572
    %v677 = vpop.f32.mrb[0].mxu0
    %v678 = vadd.f32 0.0, %v677
    %v679 = vpop.f32.mrb[0].mxu0
    %v680 = vadd.f32 0.0, %v679
    %681 = vdwg.mxu0
    %v682 = vmul.f32 %v40, %v672
    %v683 = vmul.f32 %v41, %v674
    %v684 = vmul.f32 %v42, %v678
    %v685 = vmul.f32 %v43, %v680
    %686 = vst [vmem:[%s7] sm:$0xff] %v682
    %687 = vst [vmem:[%s7 + $0x8] sm:$0xff] %v683
    %688 = vst [vmem:[%s7 + $0x10] sm:$0xff] %v684
    %689 = vst [vmem:[%s7 + $0x18] sm:$0xff] %v685
    // Predicated region
    $region34: #{mlca_forward.1} parent=1 // pred_check
      _
    $region35: #{mlca_forward.1} parent=1 // pred_check_branch
      %691 = sbr.rel (0) target = $region37
    $region36: #{mlca_forward.1} parent=1 // pred_region
      _
    $region37: #{mlca_forward.1} parent=1 // pred_fallthru
      _
    // Predicated region
    $region38: #{mlca_forward.1} parent=1 // pred_check
      _
    $region39: #{mlca_forward.1} parent=1 // pred_check_branch
      %693 = sbr.rel (0) target = $region41
    $region40: #{mlca_forward.1} parent=1 // pred_region
      _
    $region41: #{mlca_forward.1} parent=1 // pred_fallthru
      _
    %694 = vsyncpa [#allocation3], 1

</llo_original>
